<compile_context>
chip_gen: v6e
topology: v6e:2x2x1
jax: 0.10.0
libtpu: 0.0.40
codegen_flags: <defaults>
</compile_context>

<pallas_src>
import functools

import jax
import jax.numpy as jnp
from jax import lax
from jax.experimental import pallas as pl
from jax.experimental.pallas import tpu as pltpu

LN_EPS = 1e-5
_VMEM_LIMIT = 48 * 1024 * 1024   # safe on v5e/v6e (128 MiB phys) and v7x (64 MiB)
_TS_PREF = 256                   # M (sequence) tile
_TN_PREF = 512                   # N (output-feature) tile
_TK_PREF = 512                   # K (contraction) tile


def _round_up(x, m):
    return ((x + m - 1) // m) * m


def _tile_and_pad(dim, pref, align):
    """Pick a tile (multiple of `align`, <= pref) and the padded extent it divides."""
    tile = min(pref, _round_up(dim, align))
    return tile, _round_up(dim, tile)


# ---------------------------------------------------------------------------
# Stage 1: LayerNorm + positional embedding  -> bf16
# ---------------------------------------------------------------------------
def _ln_pos_kernel(x_ref, pos_ref, gamma_ref, beta_ref, o_ref, *,
                   use_ln: bool, use_pos: bool, true_features: int):
    x = x_ref[...].astype(jnp.float32)                     # (Ts, Kp)
    if use_ln:
        inv_n = 1.0 / float(true_features)
        mean = jnp.sum(x, axis=-1, keepdims=True) * inv_n  # pads are zero
        lane = lax.broadcasted_iota(jnp.int32, x.shape, 1)
        cen = jnp.where(lane < true_features, x - mean, 0.0)
        var = jnp.sum(cen * cen, axis=-1, keepdims=True) * inv_n
        x = cen * lax.rsqrt(var + LN_EPS)
        x = x * gamma_ref[...] + beta_ref[...]             # padded gamma/beta = 0
    if use_pos:
        x = x + pos_ref[...]                               # padded pos = 0
    o_ref[...] = x.astype(o_ref.dtype)


def _ln_pos_call(x, pos, gamma, beta, *, use_ln, use_pos, true_features,
                 ts, out_dtype):
    B, Sp, Kp = x.shape
    kernel = functools.partial(_ln_pos_kernel, use_ln=use_ln, use_pos=use_pos,
                               true_features=true_features)
    return pl.pallas_call(
        kernel,
        out_shape=jax.ShapeDtypeStruct((B, Sp, Kp), out_dtype),
        grid_spec=pltpu.PrefetchScalarGridSpec(
            num_scalar_prefetch=0,
            grid=(B, Sp // ts),
            in_specs=[
                pl.BlockSpec((pl.Squeezed(), ts, Kp), lambda b, s: (b, s, 0)),
                pl.BlockSpec((ts, Kp), lambda b, s: (s, 0)),
                pl.BlockSpec((1, Kp), lambda b, s: (0, 0)),
                pl.BlockSpec((1, Kp), lambda b, s: (0, 0)),
            ],
            out_specs=pl.BlockSpec((pl.Squeezed(), ts, Kp),
                                   lambda b, s: (b, s, 0)),
        ),
        compiler_params=pltpu.CompilerParams(
            dimension_semantics=("parallel", "parallel"),
            vmem_limit_bytes=_VMEM_LIMIT),
    )(x, pos, gamma, beta)


# ---------------------------------------------------------------------------
# Stages 2/3: tiled matmul (bf16 operands, f32 accumulator) + bias (+ GELU)
# ---------------------------------------------------------------------------
def _matmul_epilogue_kernel(x_ref, w_ref, b_ref, o_ref, acc_ref, *,
                            apply_gelu: bool):
    k = pl.program_id(3)

    @pl.when(k == 0)
    def _():
        acc_ref[...] = jnp.zeros_like(acc_ref)

    acc_ref[...] += jnp.dot(x_ref[...], w_ref[...],
                            preferred_element_type=jnp.float32)

    @pl.when(k == pl.num_programs(3) - 1)
    def _():
        r = acc_ref[...] + b_ref[...]
        if apply_gelu:
            # exact GELU (erf), matches torch nn.GELU()
            r = 0.5 * r * (1.0 + lax.erf(r * 0.7071067811865476))
        o_ref[...] = r.astype(o_ref.dtype)


def _tiled_linear(x, w, b, *, ts, tn, tk, apply_gelu, out_dtype):
    B, Sp, Kp = x.shape
    Kw, Np = w.shape
    assert Kw == Kp and Sp % ts == 0 and Np % tn == 0 and Kp % tk == 0

    kernel = functools.partial(_matmul_epilogue_kernel, apply_gelu=apply_gelu)
    cost = pl.CostEstimate(
        flops=2 * B * Sp * Kp * Np,
        transcendentals=(B * Sp * Np) if apply_gelu else 0,
        bytes_accessed=(x.size * x.dtype.itemsize
                        + w.size * w.dtype.itemsize
                        + b.size * b.dtype.itemsize
                        + B * Sp * Np * jnp.dtype(out_dtype).itemsize))
    return pl.pallas_call(
        kernel,
        out_shape=jax.ShapeDtypeStruct((B, Sp, Np), out_dtype),
        grid_spec=pltpu.PrefetchScalarGridSpec(
            num_scalar_prefetch=0,
            grid=(B, Sp // ts, Np // tn, Kp // tk),
            in_specs=[
                pl.BlockSpec((pl.Squeezed(), ts, tk),
                             lambda bb, s, n, k: (bb, s, k)),      # activations
                pl.BlockSpec((tk, tn), lambda bb, s, n, k: (k, n)),  # weight tile
                pl.BlockSpec((1, tn), lambda bb, s, n, k: (0, n)),   # bias tile
            ],
            out_specs=pl.BlockSpec((pl.Squeezed(), ts, tn),
                                   lambda bb, s, n, k: (bb, s, n)),
            scratch_shapes=[pltpu.VMEM((ts, tn), jnp.float32)],
        ),
        compiler_params=pltpu.CompilerParams(
            dimension_semantics=("parallel", "parallel", "parallel", "arbitrary"),
            vmem_limit_bytes=_VMEM_LIMIT),
        cost_estimate=cost,
    )(x, w, b)


# ---------------------------------------------------------------------------
# Forward pass
# ---------------------------------------------------------------------------
def image_adapter_forward(vision_outputs, params, *, ln1: bool, pos_emb: bool,
                          deep_extract: bool):
    """vision_outputs: stack of hidden states, shape (L, B, S, F_base)."""
    if deep_extract:
        x = jnp.concatenate(
            (vision_outputs[-2], vision_outputs[3], vision_outputs[7],
             vision_outputs[13], vision_outputs[20]), axis=-1)
    else:
        x = vision_outputs[-2]
    B, S, F_in = x.shape
    F_out = params["w1"].shape[1]
    out_dtype = x.dtype

    # Tile sizes / padded extents (MXU-aligned).
    ts, Sp = _tile_and_pad(S, _TS_PREF, 16)
    tk1, Kp = _tile_and_pad(F_in, _TK_PREF, 128)
    tn, Fp = _tile_and_pad(F_out, _TN_PREF, 128)
    tk2, _ = _tile_and_pad(Fp, _TK_PREF, 128)     # tk2 divides Fp by construction

    # Layout glue: zero-pad to tile multiples; weights stored/streamed as bf16.
    xp = jnp.pad(x, ((0, 0), (0, Sp - S), (0, Kp - F_in)))
    pos = jnp.pad(params["pos_emb"], ((0, Sp - S), (0, Kp - F_in)))
    gamma = jnp.pad(params["ln_gamma"], ((0, 0), (0, Kp - F_in)))
    beta = jnp.pad(params["ln_beta"], ((0, 0), (0, Kp - F_in)))
    w1 = jnp.pad(params["w1"], ((0, Kp - F_in), (0, Fp - F_out))).astype(jnp.bfloat16)
    b1 = jnp.pad(params["b1"], ((0, 0), (0, Fp - F_out)))
    w2 = jnp.pad(params["w2"], ((0, Fp - F_out), (0, Fp - F_out))).astype(jnp.bfloat16)
    b2 = jnp.pad(params["b2"], ((0, 0), (0, Fp - F_out)))

    # Stage 1: LayerNorm + pos-emb (f32 math), emit bf16 MXU operands.
    xn = _ln_pos_call(xp, pos, gamma, beta, use_ln=ln1, use_pos=pos_emb,
                      true_features=F_in, ts=ts, out_dtype=jnp.bfloat16)
    # Stage 2: linear1 + exact-erf GELU.
    h = _tiled_linear(xn, w1, b1, ts=ts, tn=tn, tk=tk1,
                      apply_gelu=True, out_dtype=jnp.bfloat16)
    # Stage 3: linear2.
    o = _tiled_linear(h, w2, b2, ts=ts, tn=tn, tk=tk2,
                      apply_gelu=False, out_dtype=out_dtype)

    o = o[:, :S, :F_out]

    # other_tokens(tensor([0, 1]).expand(B, -1)) -> (B, 2, F_out); glue in JAX.
    other = jnp.broadcast_to(params["other_tokens"][:2][None],
                             (B, 2, F_out)).astype(out_dtype)
    return jnp.concatenate((other[:, 0:1], o, other[:, 1:2]), axis=1)


# ---------------------------------------------------------------------------
# Pure-JAX f32 reference (torch semantics) and param init
# ---------------------------------------------------------------------------
def _reference_forward(vision_outputs, params, *, ln1, pos_emb, deep_extract):
    if deep_extract:
        x = jnp.concatenate(
            (vision_outputs[-2], vision_outputs[3], vision_outputs[7],
             vision_outputs[13], vision_outputs[20]), axis=-1)
    else:
        x = vision_outputs[-2]
    if ln1:
        mean = jnp.mean(x, axis=-1, keepdims=True)
        var = jnp.mean((x - mean) ** 2, axis=-1, keepdims=True)
        x = (x - mean) / jnp.sqrt(var + LN_EPS)
        x = x * params["ln_gamma"][0] + params["ln_beta"][0]
    if pos_emb:
        x = x + params["pos_emb"][None]
    h = x @ params["w1"] + params["b1"][0]
    h = 0.5 * h * (1.0 + lax.erf(h / jnp.sqrt(2.0)))
    o = h @ params["w2"] + params["b2"][0]
    B = x.shape[0]
    F_out = params["w1"].shape[1]
    other = jnp.broadcast_to(params["other_tokens"][:2][None], (B, 2, F_out))
    return jnp.concatenate((other[:, 0:1], o, other[:, 1:2]), axis=1)


def init_params(key, input_features, output_features, num_image_tokens):
    ks = jax.random.split(key, 6)
    return {
        # linear1: torch shape (out, in) -> stored transposed (in, out)
        "w1": jax.random.normal(ks[0], (input_features, output_features),
                                jnp.float32) * 0.02,
        "b1": jax.random.normal(ks[1], (1, output_features), jnp.float32) * 0.02,
        "w2": jax.random.normal(ks[2], (output_features, output_features),
                                jnp.float32) * 0.02,
        "b2": jax.random.normal(ks[3], (1, output_features), jnp.float32) * 0.02,
        # nn.LayerNorm(input_features) init: gamma=1, beta=0
        "ln_gamma": jnp.ones((1, input_features), jnp.float32),
        "ln_beta": jnp.zeros((1, input_features), jnp.float32),
        # pos_emb initialized to zeros in torch; small randoms here so the add
        # is actually exercised (deterministic).
        "pos_emb": jax.random.normal(ks[4], (num_image_tokens, input_features),
                                     jnp.float32) * 0.02,
        # nn.Embedding(3, output_features), normal(0, 0.02)
        "other_tokens": jax.random.normal(ks[5], (3, output_features),
                                          jnp.float32) * 0.02,
    }


if __name__ == "__main__":
    key = jax.random.PRNGKey(0)

    B = 2
    S = 8                      # num_image_tokens
    F_BASE = 32                # per-layer vision hidden size
    F_OUT = 64
    N_LAYERS = 24
    DEEP_EXTRACT = True
    LN1 = True
    POS_EMB = True

    F_IN = F_BASE * 5 if DEEP_EXTRACT else F_BASE

    k_vis, k_par = jax.random.split(key)
    vision_outputs = jax.random.normal(
        k_vis, (N_LAYERS, B, S, F_BASE), jnp.float32)

    params = init_params(k_par, F_IN, F_OUT, S)

    out = image_adapter_forward(
        vision_outputs, params, ln1=LN1, pos_emb=POS_EMB,
        deep_extract=DEEP_EXTRACT)
    out = jax.block_until_ready(out)

    ref = _reference_forward(
        vision_outputs, params, ln1=LN1, pos_emb=POS_EMB,
        deep_extract=DEEP_EXTRACT)

    assert out.shape == (B, S + 2, F_OUT), out.shape
    # bf16 MXU operands / bf16 weights vs f32 reference -> relaxed tolerance.
    assert jnp.allclose(out, ref, atol=1e-2, rtol=1e-2), (
        "mismatch vs reference, max|diff|=%g" % float(jnp.max(jnp.abs(out - ref))))
    print("KERNEL_OK")
</pallas_src>

<mosaic_0001>
module attributes {stable_mosaic.version = 11 : i64} {
  func.func @_ln_pos_kernel(%arg0: i32, %arg1: i32, %arg2: memref<1x16x256xf32, #tpu.memory_space<vmem>>, %arg3: memref<16x256xf32, #tpu.memory_space<vmem>>, %arg4: memref<1x256xf32, #tpu.memory_space<vmem>>, %arg5: memref<1x256xf32, #tpu.memory_space<vmem>>, %arg6: memref<1x16x256xbf16, #tpu.memory_space<vmem>>) attributes {dimension_semantics = [#tpu.dimension_semantics<parallel>, #tpu.dimension_semantics<parallel>], iteration_bounds = array<i64: 2, 1>, scalar_prefetch = 0 : i64, scratch_operands = 0 : i64, tpu.core_type = #tpu.core_type<tc>, window_params = [{transform_indices = @transform_0, window_bounds = array<i64: 1, 16, 256>}, {transform_indices = @transform_1, window_bounds = array<i64: 16, 256>}, {pipeline_mode = #tpu.pipeline_mode<synchronous>, transform_indices = @transform_2, window_bounds = array<i64: 1, 256>}, {pipeline_mode = #tpu.pipeline_mode<synchronous>, transform_indices = @transform_3, window_bounds = array<i64: 1, 256>}, {transform_indices = @transform_4, window_bounds = array<i64: 1, 16, 256>}]} {
    %c0 = arith.constant 0 : index
    %c0_0 = arith.constant 0 : index
    %c0_1 = arith.constant 0 : index
    %0 = vector.load %arg2[%c0, %c0_0, %c0_1] : memref<1x16x256xf32, #tpu.memory_space<vmem>>, vector<1x16x256xf32>
    %1 = vector.shape_cast %0 : vector<1x16x256xf32> to vector<16x256xf32>
    %cst = arith.constant dense<0.000000e+00> : vector<16xf32>
    %2 = vector.multi_reduction <add>, %1, %cst [1] : vector<16x256xf32> to vector<16xf32>
    %3 = vector.shape_cast %2 : vector<16xf32> to vector<16x1xf32>
    %cst_2 = arith.constant 6.250000e-03 : f32
    %4 = vector.broadcast %cst_2 : f32 to vector<16x1xf32>
    %5 = arith.mulf %3, %4 : vector<16x1xf32>
    %6 = tpu.iota {dimensions = array<i32: 1>} : vector<16x256xi32>
    %c160_i32 = arith.constant 160 : i32
    %7 = vector.broadcast %c160_i32 : i32 to vector<16x256xi32>
    %8 = arith.cmpi slt, %6, %7 : vector<16x256xi32>
    %9 = vector.broadcast %5 : vector<16x1xf32> to vector<16x256xf32>
    %10 = arith.subf %1, %9 : vector<16x256xf32>
    %cst_3 = arith.constant 0.000000e+00 : f32
    %11 = vector.broadcast %cst_3 : f32 to vector<16x256xf32>
    %12 = arith.select %8, %10, %11 : vector<16x256xi1>, vector<16x256xf32>
    %13 = arith.mulf %12, %12 : vector<16x256xf32>
    %cst_4 = arith.constant dense<0.000000e+00> : vector<16xf32>
    %14 = vector.multi_reduction <add>, %13, %cst_4 [1] : vector<16x256xf32> to vector<16xf32>
    %15 = vector.shape_cast %14 : vector<16xf32> to vector<16x1xf32>
    %cst_5 = arith.constant 6.250000e-03 : f32
    %16 = vector.broadcast %cst_5 : f32 to vector<16x1xf32>
    %17 = arith.mulf %15, %16 : vector<16x1xf32>
    %cst_6 = arith.constant 9.99999974E-6 : f32
    %18 = vector.broadcast %cst_6 : f32 to vector<16x1xf32>
    %19 = arith.addf %17, %18 : vector<16x1xf32>
    %20 = math.rsqrt %19 : vector<16x1xf32>
    %21 = vector.broadcast %20 : vector<16x1xf32> to vector<16x256xf32>
    %22 = arith.mulf %12, %21 : vector<16x256xf32>
    %c0_7 = arith.constant 0 : index
    %c0_8 = arith.constant 0 : index
    %23 = vector.load %arg4[%c0_7, %c0_8] : memref<1x256xf32, #tpu.memory_space<vmem>>, vector<1x256xf32>
    %24 = vector.broadcast %23 : vector<1x256xf32> to vector<16x256xf32>
    %25 = arith.mulf %22, %24 : vector<16x256xf32>
    %c0_9 = arith.constant 0 : index
    %c0_10 = arith.constant 0 : index
    %26 = vector.load %arg5[%c0_9, %c0_10] : memref<1x256xf32, #tpu.memory_space<vmem>>, vector<1x256xf32>
    %27 = vector.broadcast %26 : vector<1x256xf32> to vector<16x256xf32>
    %28 = arith.addf %25, %27 : vector<16x256xf32>
    %c0_11 = arith.constant 0 : index
    %c0_12 = arith.constant 0 : index
    %29 = vector.load %arg3[%c0_11, %c0_12] : memref<16x256xf32, #tpu.memory_space<vmem>>, vector<16x256xf32>
    %30 = arith.addf %28, %29 : vector<16x256xf32>
    %31 = arith.truncf %30 : vector<16x256xf32> to vector<16x256xbf16>
    %c0_13 = arith.constant 0 : index
    %c0_14 = arith.constant 0 : index
    %c0_15 = arith.constant 0 : index
    %32 = vector.load %arg6[%c0_13, %c0_14, %c0_15] : memref<1x16x256xbf16, #tpu.memory_space<vmem>>, vector<1x16x256xbf16>
    %33 = vector.shape_cast %32 : vector<1x16x256xbf16> to vector<16x256xbf16>
    %34 = vector.shape_cast %31 : vector<16x256xbf16> to vector<1x16x256xbf16>
    tpu.vector_store %arg6[%c0_13, %c0_14, %c0_15], %34 {strides = array<i32>} : memref<1x16x256xbf16, #tpu.memory_space<vmem>>, vector<1x16x256xbf16>,
    return
  }
  func.func @transform_0(%arg0: i32, %arg1: i32) -> (i32, i32, i32) {
    %c0_i32 = arith.constant 0 : i32
    %c0_i32_0 = arith.constant 0 : i32
    return %arg0, %arg1, %c0_i32 : i32, i32, i32
  }
  func.func @transform_1(%arg0: i32, %arg1: i32) -> (i32, i32) {
    %c0_i32 = arith.constant 0 : i32
    %c0_i32_0 = arith.constant 0 : i32
    return %arg1, %c0_i32 : i32, i32
  }
  func.func @transform_2(%arg0: i32, %arg1: i32) -> (i32, i32) {
    %c0_i32 = arith.constant 0 : i32
    %c0_i32_0 = arith.constant 0 : i32
    %c0_i32_1 = arith.constant 0 : i32
    return %c0_i32, %c0_i32_0 : i32, i32
  }
  func.func @transform_3(%arg0: i32, %arg1: i32) -> (i32, i32) {
    %c0_i32 = arith.constant 0 : i32
    %c0_i32_0 = arith.constant 0 : i32
    %c0_i32_1 = arith.constant 0 : i32
    return %c0_i32, %c0_i32_0 : i32, i32
  }
  func.func @transform_4(%arg0: i32, %arg1: i32) -> (i32, i32, i32) {
    %c0_i32 = arith.constant 0 : i32
    %c0_i32_0 = arith.constant 0 : i32
    return %arg0, %arg1, %c0_i32 : i32, i32, i32
  }
}

</mosaic_0001>

<llo_original>
// kernel: tpu_custom_call.1
$region0: #{tpu_custom_call.1}
  #allocation0 [shape = 'u32[]', space=smem, size = 0x4, offset = 0x4, fixed_abs, tag = 'smem constant byte address 0x4 - core index']
  #allocation1 [shape = 'u32[144,128]{1,0:T(1,128)}', space=vmem, size = 0x12000, scoped, tag = 'internal scratch']
  %s0 = inlined_call_operand.hbm [shape: f32[2,16,256], index: 0, kind: input, shape index: {}]
  %s1 = inlined_call_operand.hbm [shape: f32[16,256], index: 1, kind: input, shape index: {}]
  %s2 = inlined_call_operand.vmem [shape: f32[1,256], index: 2, kind: input, shape index: {}]
  %s3 = inlined_call_operand.vmem [shape: f32[1,256], index: 3, kind: input, shape index: {}]
  %s4 = inlined_call_operand.hbm [shape: bf16[2,16,256], index: 4, kind: output, shape index: {}]
  %s5 = sld [smem:[#allocation0]]
  $region57: #{tpu_custom_call.1} parent=0
    _
  %s7 = ssub.s32 1, %s5
  %s8 = scalar_select 0, %s7, %s5
  $region1: #{tpu_custom_call.1} parent=0
    #allocation2 [shape = 'u8[32768]{0}', space=vmem, size = 0x8000, scoped, tag = 'input window, operand 0']
    #allocation3 [shape = 's32[2]{0}', space=sflag, size = 0x8, scoped, tag = 'scoped memory for tpu_custom_call.1']
    #allocation4 [shape = 's32[2]{0}', space=sflag, size = 0x8, scoped, tag = 'scoped memory for tpu_custom_call.1']
    #allocation5 [shape = 'u8[16384]{0}', space=vmem, size = 0x4000, scoped, tag = 'input window, operand 1, single buffered']
    #allocation6 [shape = 's32[1]{0}', space=sflag, size = 0x4, scoped, tag = 'scoped memory for tpu_custom_call.1']
    #allocation7 [shape = 'u8[16384]{0}', space=vmem, size = 0x4000, scoped, tag = 'output window, operand 0']
    %9 = vsyncpa [#allocation3], 0
    %s10 = scalar_lea.sflag [#allocation3], 1
    %11 = vsyncpa %s10, 0
    %12 = vsyncpa [#allocation6], 0
    %13 = vsyncpa [#allocation4], 0
    %s14 = scalar_lea.sflag [#allocation4], 1
    %15 = vsyncpa %s14, 0
    loop: start=0, step=1, limit=4
    $region2: #{tpu_custom_call.1} parent=1 // loop_pre_header
      _
    $region3: #{tpu_custom_call.1} parent=1 // loop_header
      %s17 = sphi 0, %s21
      %p18 = scmp.ge.s32.totalorder %s17, 4
      %s24 = sphi 0, %s36
      %s25 = sphi 0, %s32
      %s26 = sphi 0, %s24
      %s27 = sphi 0, %s25
      %s28 = sphi 0, %s26
      %s29 = sphi 0, %s27
      %s41 = sphi 0, %s43
      %s44 = sphi 0, %s41
      %s45 = sphi 0, %s44
      %s61 = sphi 0, %s45
      %s67 = sphi 0, %s69
      %s70 = sphi 0, %s67
      %s71 = sphi 0, %s70
      %s87 = sphi 0, %s71
      %s91 = sphi 0, %s91
      %s93 = sphi 0, %s91
      %s94 = sphi 0, %s93
      %s108 = sphi 0, %s94
      %s112 = sphi 0, %s112
      %s114 = sphi 0, %s112
      %s115 = sphi 0, %s114
      %s129 = sphi 0, %s115
      %s137 = sphi 0, %s139
      %s140 = sphi 0, %s137
      %s141 = sphi 0, %s140
      %s157 = sphi 0, %s141
    $region4: #{tpu_custom_call.1} parent=1 // loop_header_branch
      %20 = sbr.rel (%p18) target = $region8
    $region5: #{tpu_custom_call.1} parent=1 // loop_body
      %s22 = ssub.s32 %s17, 1
      %s23 = ssub.s32 %s17, 2
      %s30 = sadd.s32 1, %s25
      %p31 = scmp.ge.s32.totalorder %s30, 1
      %s32 = scalar_select %p31, 0, %s30
      %s33 = sadd.s32 1, %s24
      %s34 = scalar_select %p31, %s33, %s24
      %p35 = scmp.ge.s32.totalorder %s34, 2
      %s36 = scalar_select %p35, 0, %s34
      %s37 = ssub.s32 %s24, %s36
      %s38 = ssub.s32 %s25, %s32
      %s39 = sor.u32 %s37, %s38
      %p40 = scmp.eq.s32.totalorder %s39, 0
      %s42 = sadd.s32 %s41, 1
      %s43 = scalar_select %p40, %s41, %s42
      %p46 = pneg %p40
      %p47 = scmp.eq.s32.totalorder %s17, 1
      %p48 = por %p46, %p47
      %p49 = scmp.ne.s32.totalorder %s41, %s44
      %p50 = scmp.eq.s32.totalorder %s17, 0
      %p51 = por %p49, %p50
      %p52 = scmp.ne.s32.totalorder %s41, %s44
      %p53 = scmp.eq.s32.totalorder %s22, 1
      %p54 = por %p52, %p53
      %p55 = scmp.ne.s32.totalorder %s44, %s45
      %p56 = scmp.eq.s32.totalorder %s22, 0
      %p57 = por %p55, %p56
      %p58 = scmp.ne.s32.totalorder %s44, %s45
      %p59 = scmp.eq.s32.totalorder %s23, 1
      %p60 = por %p58, %p59
      %p62 = scmp.ne.s32.totalorder %s45, %s61
      %p63 = scmp.eq.s32.totalorder %s23, 0
      %p64 = por %p62, %p63
      %s65 = ssub.s32 %s25, %s32
      %p66 = scmp.eq.s32.totalorder %s65, 0
      %s68 = sadd.s32 %s67, 1
      %s69 = scalar_select %p66, %s67, %s68
      %p72 = pneg %p66
      %p73 = scmp.eq.s32.totalorder %s17, 1
      %p74 = por %p72, %p73
      %p75 = scmp.ne.s32.totalorder %s67, %s70
      %p76 = scmp.eq.s32.totalorder %s17, 0
      %p77 = por %p75, %p76
      %p78 = scmp.ne.s32.totalorder %s67, %s70
      %p79 = scmp.eq.s32.totalorder %s22, 1
      %p80 = por %p78, %p79
      %p81 = scmp.ne.s32.totalorder %s70, %s71
      %p82 = scmp.eq.s32.totalorder %s22, 0
      %p83 = por %p81, %p82
      %p84 = scmp.ne.s32.totalorder %s70, %s71
      %p85 = scmp.eq.s32.totalorder %s23, 1
      %p86 = por %p84, %p85
      %p88 = scmp.ne.s32.totalorder %s71, %s87
      %p89 = scmp.eq.s32.totalorder %s23, 0
      %p90 = por %p88, %p89
      %s92 = sadd.s32 %s91, 1
      %p95 = scmp.eq.s32.totalorder %s17, 1
      %p96 = scmp.ne.s32.totalorder %s91, %s93
      %p97 = scmp.eq.s32.totalorder %s17, 0
      %p98 = por %p96, %p97
      %p99 = scmp.ne.s32.totalorder %s91, %s93
      %p100 = scmp.eq.s32.totalorder %s22, 1
      %p101 = por %p99, %p100
      %p102 = scmp.ne.s32.totalorder %s93, %s94
      %p103 = scmp.eq.s32.totalorder %s22, 0
      %p104 = por %p102, %p103
      %p105 = scmp.ne.s32.totalorder %s93, %s94
      %p106 = scmp.eq.s32.totalorder %s23, 1
      %p107 = por %p105, %p106
      %p109 = scmp.ne.s32.totalorder %s94, %s108
      %p110 = scmp.eq.s32.totalorder %s23, 0
      %p111 = por %p109, %p110
      %s113 = sadd.s32 %s112, 1
      %p116 = scmp.eq.s32.totalorder %s17, 1
      %p117 = scmp.ne.s32.totalorder %s112, %s114
      %p118 = scmp.eq.s32.totalorder %s17, 0
      %p119 = por %p117, %p118
      %p120 = scmp.ne.s32.totalorder %s112, %s114
      %p121 = scmp.eq.s32.totalorder %s22, 1
      %p122 = por %p120, %p121
      %p123 = scmp.ne.s32.totalorder %s114, %s115
      %p124 = scmp.eq.s32.totalorder %s22, 0
      %p125 = por %p123, %p124
      %p126 = scmp.ne.s32.totalorder %s114, %s115
      %p127 = scmp.eq.s32.totalorder %s23, 1
      %p128 = por %p126, %p127
      %p130 = scmp.ne.s32.totalorder %s115, %s129
      %p131 = scmp.eq.s32.totalorder %s23, 0
      %p132 = por %p130, %p131
      %s133 = ssub.s32 %s24, %s36
      %s134 = ssub.s32 %s25, %s32
      %s135 = sor.u32 %s133, %s134
      %p136 = scmp.eq.s32.totalorder %s135, 0
      %s138 = sadd.s32 %s137, 1
      %s139 = scalar_select %p136, %s137, %s138
      %p142 = pneg %p136
      %p143 = scmp.eq.s32.totalorder %s17, 1
      %p144 = por %p142, %p143
      %p145 = scmp.ne.s32.totalorder %s137, %s140
      %p146 = scmp.eq.s32.totalorder %s17, 0
      %p147 = por %p145, %p146
      %p148 = scmp.ne.s32.totalorder %s137, %s140
      %p149 = scmp.eq.s32.totalorder %s22, 1
      %p150 = por %p148, %p149
      %p151 = scmp.ne.s32.totalorder %s140, %s141
      %p152 = scmp.eq.s32.totalorder %s22, 0
      %p153 = por %p151, %p152
      %p154 = scmp.ne.s32.totalorder %s140, %s141
      %p155 = scmp.eq.s32.totalorder %s23, 1
      %p156 = por %p154, %p155
      %p158 = scmp.ne.s32.totalorder %s141, %s157
      %p159 = scmp.eq.s32.totalorder %s23, 0
      %p160 = por %p158, %p159
      %p161 = scmp.le.s32.totalorder 1, %s17
      %p162 = scmp.lt.s32.totalorder %s17, 3
      %p163 = pnand %p161, %p162
      %p164 = pneg %p163
      // Predicated region
      $region9: #{tpu_custom_call.1} parent=5 // pred_check
        _
      $region10: #{tpu_custom_call.1} parent=5 // pred_check_branch
        %166 = sbr.rel (%p163) target = $region12
      $region11: #{tpu_custom_call.1} parent=5 // pred_region
        %s167 = ssub.s32 %s17, 1
        // Predicated region
        $region13: #{tpu_custom_call.1} parent=11 // pred_check
          %p168 = pneg %p83
        $region14: #{tpu_custom_call.1} parent=11 // pred_check_branch
          %170 = sbr.rel (%p168) target = $region16
        $region15: #{tpu_custom_call.1} parent=11 // pred_region
          %s171 = smul.u32 2, %s27
          %s173 = ssub.s32 512, 512
          %174 = vsyncadd [#allocation6], %s173
          %s175 = smul.addr %s171, 2
          %s176 = smul.addr %s175, 128
          %s177 = scalar_lea.hbm %s1, %s176
          %s178 = sshll.u32 [#allocation5], 4
          %s179 = int_to_ptr.vmem [resolvable:$true] %s178
          %184 = dma.hbm_to_vmem [thread:$0]  %s177, 512, %s179, [#allocation6], 256, 256, 16
        $region16: #{tpu_custom_call.1} parent=11 // pred_fallthru
          _
        // Predicated region
        $region17: #{tpu_custom_call.1} parent=11 // pred_check
          %p185 = pneg %p104
        $region18: #{tpu_custom_call.1} parent=11 // pred_check_branch
          %187 = sbr.rel (%p185) target = $region20
        $region19: #{tpu_custom_call.1} parent=11 // pred_region
          _
        $region20: #{tpu_custom_call.1} parent=11 // pred_fallthru
          _
        // Predicated region
        $region21: #{tpu_custom_call.1} parent=11 // pred_check
          %p188 = pneg %p125
        $region22: #{tpu_custom_call.1} parent=11 // pred_check_branch
          %190 = sbr.rel (%p188) target = $region24
        $region23: #{tpu_custom_call.1} parent=11 // pred_region
          _
        $region24: #{tpu_custom_call.1} parent=11 // pred_fallthru
          _
      $region12: #{tpu_custom_call.1} parent=5 // pred_fallthru
        _
      %p191 = scmp.lt.s32.totalorder %s17, 2
      // Predicated region
      $region25: #{tpu_custom_call.1} parent=5 // pred_check
        %p192 = pneg %p191
      $region26: #{tpu_custom_call.1} parent=5 // pred_check_branch
        %194 = sbr.rel (%p192) target = $region28
      $region27: #{tpu_custom_call.1} parent=5 // pred_region
        // Predicated region
        $region29: #{tpu_custom_call.1} parent=27 // pred_check
          %p195 = pneg %p51
        $region30: #{tpu_custom_call.1} parent=27 // pred_check_branch
          %197 = sbr.rel (%p195) target = $region32
        $region31: #{tpu_custom_call.1} parent=27 // pred_region
          %s198 = sand.u32 %s41, 1
          %s199 = scalar_lea.sflag [#allocation3], %s198
          %s200 = sand.u32 %s41, 1
          %s201 = smul.addr %s200, 32
          %s202 = scalar_lea.vmem [#allocation2], %s201
          %s203 = smul.u32 2, %s25
          %s205 = ssub.s32 512, 512
          %206 = vsyncadd %s199, %s205
          %s207 = smul.addr %s203, 2
          %s208 = smul.addr %s24, 4
          %s209 = sadd.s32 %s207, %s208
          %s210 = smul.addr %s209, 128
          %s211 = scalar_lea.hbm %s0, %s210
          %s212 = sshll.u32 %s202, 4
          %s213 = int_to_ptr.vmem [resolvable:$true] %s212
          %218 = dma.hbm_to_vmem [thread:$0]  %s211, 512, %s213, %s199, 256, 256, 16
        $region32: #{tpu_custom_call.1} parent=27 // pred_fallthru
          _
      $region28: #{tpu_custom_call.1} parent=5 // pred_fallthru
        _
      %p219 = scmp.le.s32.totalorder 1, %s17
      %p220 = scmp.lt.s32.totalorder %s17, 3
      %p221 = pnand %p219, %p220
      %p222 = pneg %p221
      // Predicated region
      $region33: #{tpu_custom_call.1} parent=5 // pred_check
        _
      $region34: #{tpu_custom_call.1} parent=5 // pred_check_branch
        %224 = sbr.rel (%p221) target = $region36
      $region35: #{tpu_custom_call.1} parent=5 // pred_region
        %s225 = ssub.s32 %s17, 1
        %s226 = sand.u32 %s44, 1
        %s227 = scalar_lea.sflag [#allocation3], %s226
        %s228 = sand.u32 %s44, 1
        %s229 = smul.addr %s228, 32
        %s230 = scalar_lea.vmem [#allocation2], %s229
        // Predicated region
        $region37: #{tpu_custom_call.1} parent=35 // pred_check
          %p231 = pneg %p57
        $region38: #{tpu_custom_call.1} parent=35 // pred_check_branch
          %233 = sbr.rel (%p231) target = $region40
        $region39: #{tpu_custom_call.1} parent=35 // pred_region
          %234 = dma.done %s227, 512
        $region40: #{tpu_custom_call.1} parent=35 // pred_fallthru
          _
        // Predicated region
        $region41: #{tpu_custom_call.1} parent=35 // pred_check
          %p235 = pneg %p83
        $region42: #{tpu_custom_call.1} parent=35 // pred_check_branch
          %237 = sbr.rel (%p235) target = $region44
        $region43: #{tpu_custom_call.1} parent=35 // pred_region
          %238 = dma.done [#allocation6], 512
        $region44: #{tpu_custom_call.1} parent=35 // pred_fallthru
          _
        %s239 = sand.u32 %s44, 1
        %s240 = scalar_lea.sflag [#allocation3], %s239
        %s241 = sand.u32 %s44, 1
        %s242 = smul.addr %s241, 32
        %s243 = scalar_lea.vmem [#allocation2], %s242
        %p244 = pneg %p57
        %p245 = pneg %p54
        %p246 = pneg %p83
        %p247 = pneg %p80
        %p248 = pneg %p104
        %p249 = pneg %p101
        %p250 = pneg %p125
        %p251 = pneg %p122
        %p252 = pneg %p153
        %p253 = pneg %p150
        %s254 = sand.u32 %s140, 1
        %s255 = scalar_lea.sflag [#allocation4], %s254
        %s256 = sand.u32 %s140, 1
        %s257 = smul.addr %s256, 16
        %s258 = scalar_lea.vmem [#allocation7], %s257
        %s259 = smul.u32 2, %s27
        %s260 = smul.u32 2, %s27
        %s261 = smul.u32 2, %s27
        %v262 = vld [vmem:[%s230] sm:$0xff]
        %v263 = vld [vmem:[%s230 + $0x8] sm:$0xff]
        %v264 = vld [vmem:[%s230 + $0x10] sm:$0xff]
        %v265 = vld [vmem:[%s230 + $0x18] sm:$0xff]
        %v266 = vadd.f32 %v262, %v263
        %267 = vadd.xlane.f32.xlu0 %v266
        %v268 = vpop.xlane.xlu0 %267
        %v269 = vadd.f32 %v264, %v265
        %270 = vadd.xlane.f32.xlu0 %v269
        %v271 = vpop.xlane.xlu0 %270
        %v272 = vmul.f32 %v268, 0.00625
        %v273 = vmul.f32 %v271, 0.00625
        %v274 = vlaneseq
        %v275 = vand.u32 %v274, 127
        %v276 = vadd.s32 %v275, 128
        %vm277 = vcmp.lt.s32.totalorder %v275, 160
        %vm278 = vcmp.lt.s32.totalorder %v276, 160
        %v279 = vsub.f32 %v262, %v272
        %v280 = vsub.f32 %v263, %v272
        %v281 = vsub.f32 %v264, %v273
        %v282 = vsub.f32 %v265, %v273
        %v283 = vsel %vm277, %v279, 0.0
        %v284 = vsel %vm278, %v280, 0.0
        %v285 = vsel %vm277, %v281, 0.0
        %v286 = vsel %vm278, %v282, 0.0
        %v287 = vmul.f32 %v283, %v283
        %v288 = vmul.f32 %v284, %v284
        %v289 = vmul.f32 %v285, %v285
        %v290 = vmul.f32 %v286, %v286
        %v291 = vadd.f32 %v287, %v288
        %292 = vadd.xlane.f32.xlu0 %v291
        %v293 = vpop.xlane.xlu0 %292
        %v294 = vadd.f32 %v289, %v290
        %295 = vadd.xlane.f32.xlu0 %v294
        %v296 = vpop.xlane.xlu0 %295
        %v297 = vmul.f32 %v293, 0.00625
        %v298 = vmul.f32 %v296, 0.00625
        %v299 = vadd.f32 %v297, 1e-05
        %v300 = vadd.f32 %v298, 1e-05
        %v301 = vrsqrt.pop %v299
        %v302 = vrsqrt.pop %v300
        %v303 = vmul.f32 %v283, %v301
        %v304 = vmul.f32 %v284, %v301
        %v305 = vmul.f32 %v285, %v302
        %v306 = vmul.f32 %v286, %v302
        %v307 = vld [vmem:[%s2] sm:$0x3]
        %v309 = vlaneseq
        %v310 = vshrl.u32 %v309, 7
        %v311 = vsub.s32 0, %v310
        %v312 = vrot.slane %v307, %v311
        %v313 = vlaneseq
        %v314 = vshrl.u32 %v313, 7
        %v315 = vsub.s32 1, %v314
        %v316 = vrot.slane %v307, %v315
        %v319 = vmul.f32 %v303, %v312
        %v320 = vmul.f32 %v304, %v316
        %v321 = vmul.f32 %v305, %v312
        %v322 = vmul.f32 %v306, %v316
        %v323 = vld [vmem:[%s3] sm:$0x3]
        %v325 = vlaneseq
        %v326 = vshrl.u32 %v325, 7
        %v327 = vsub.s32 0, %v326
        %v328 = vrot.slane %v323, %v327
        %v329 = vlaneseq
        %v330 = vshrl.u32 %v329, 7
        %v331 = vsub.s32 1, %v330
        %v332 = vrot.slane %v323, %v331
        %v335 = vadd.f32 %v319, %v328
        %v336 = vadd.f32 %v320, %v332
        %v337 = vadd.f32 %v321, %v328
        %v338 = vadd.f32 %v322, %v332
        %v339 = vld [vmem:[#allocation5] sm:$0xff]
        %v340 = vld [vmem:[#allocation5 + $0x8] sm:$0xff]
        %v341 = vld [vmem:[#allocation5 + $0x10] sm:$0xff]
        %v342 = vld [vmem:[#allocation5 + $0x18] sm:$0xff]
        %v343 = vadd.f32 %v335, %v339
        %v344 = vadd.f32 %v336, %v340
        %v345 = vadd.f32 %v337, %v341
        %v346 = vadd.f32 %v338, %v342
        %v347 = vpack.c.bf16 %v345, %v343
        %v348 = vpack.c.bf16 %v346, %v344
        %v351 = vunpack.c.l.b16 %v347
        %v352 = vunpack.c.l.b16 %v348
        %v353 = vunpack.c.h.b16 %v347
        %v354 = vunpack.c.h.b16 %v348
        %v355 = vpack.c.b16 %v352, %v351
        %v356 = vpack.c.b16 %v354, %v353
        %359 = vst [vmem:[%s258] sm:$0xff] %v355
        %360 = vst [vmem:[%s258 + $0x8] sm:$0xff] %v356
        %s361 = sand.u32 %s140, 1
        %s362 = scalar_lea.sflag [#allocation4], %s361
        %s363 = sand.u32 %s140, 1
        %s364 = smul.addr %s363, 16
        %s365 = scalar_lea.vmem [#allocation7], %s364
        // Predicated region
        $region45: #{tpu_custom_call.1} parent=35 // pred_check
          %p366 = pneg %p150
        $region46: #{tpu_custom_call.1} parent=35 // pred_check_branch
          %368 = sbr.rel (%p366) target = $region48
        $region47: #{tpu_custom_call.1} parent=35 // pred_region
          %s369 = smul.u32 2, %s27
          %s371 = ssub.s32 256, 256
          %372 = vsyncadd %s362, %s371
          %s373 = smul.addr %s369, 2
          %s374 = smul.addr %s26, 4
          %s375 = sadd.s32 %s373, %s374
          %s376 = smul.addr %s375, 64
          %s377 = scalar_lea.hbm %s4, %s376
          %s378 = sshll.u32 %s365, 4
          %s379 = int_to_ptr.vmem [resolvable:$true] %s378
          %384 = dma.vmem_to_hbm [thread:$0]  %s379, 256, %s377, %s362, 128, 128, 8
        $region48: #{tpu_custom_call.1} parent=35 // pred_fallthru
          _
      $region36: #{tpu_custom_call.1} parent=5 // pred_fallthru
        _
      %p385 = scmp.le.s32.totalorder 2, %s17
      // Predicated region
      $region49: #{tpu_custom_call.1} parent=5 // pred_check
        %p386 = pneg %p385
      $region50: #{tpu_custom_call.1} parent=5 // pred_check_branch
        %388 = sbr.rel (%p386) target = $region52
      $region51: #{tpu_custom_call.1} parent=5 // pred_region
        %s389 = ssub.s32 %s17, 2
        // Predicated region
        $region53: #{tpu_custom_call.1} parent=51 // pred_check
          %p390 = pneg %p156
        $region54: #{tpu_custom_call.1} parent=51 // pred_check_branch
          %392 = sbr.rel (%p390) target = $region56
        $region55: #{tpu_custom_call.1} parent=51 // pred_region
          %s393 = sand.u32 %s141, 1
          %s394 = scalar_lea.sflag [#allocation4], %s393
          %s395 = sand.u32 %s141, 1
          %s396 = smul.addr %s395, 16
          %s397 = scalar_lea.vmem [#allocation7], %s396
          %398 = dma.done %s394, 256
        $region56: #{tpu_custom_call.1} parent=51 // pred_fallthru
          _
      $region52: #{tpu_custom_call.1} parent=5 // pred_fallthru
        _
    $region6: #{tpu_custom_call.1} parent=1 // loop_footer
      %s21 = sadd.s32 1, %s17
    $region7: #{tpu_custom_call.1} parent=1 // loop_footer_branch
      %16 = sbr.rel target = $region3
    $region8: #{tpu_custom_call.1} parent=1 // loop_exit
      _
    %399 = vsyncpa [#allocation3], 1
    %s400 = scalar_lea.sflag [#allocation3], 1
    %401 = vsyncpa %s400, 1
    %402 = vsyncpa [#allocation6], 1
    %403 = vsyncpa [#allocation4], 1
    %s404 = scalar_lea.sflag [#allocation4], 1
    %405 = vsyncpa %s404, 1

</llo_original>
